<compile_context>
chip_gen: v6e
topology: v6e:2x2x1
jax: 0.10.0
libtpu: 0.0.40
codegen_flags: <defaults>
</compile_context>

<pallas_src>
import functools

import jax
import jax.numpy as jnp
from jax import lax
from jax.experimental import pallas as pl
from jax.experimental.pallas import tpu as pltpu


def _moco_neg_kernel(q_ref, mem_ref, neg_ref, *, inv_T):
    """One K-tile of the negative logits.

    q_ref:   (M, n_dim)      query features (resident across the grid;
                             M = bsz, or 2*bsz when q and q_jig are fused)
    mem_ref: (tile_k, n_dim) tile of the memory queue (bf16 or f32)
    neg_ref: (M, tile_k)     negative logits / T for this tile
    """
    # q @ mem_tile.T : contraction on the last dim of both operands
    # (standard attention-style MXU pattern), f32 accumulation.
    neg = lax.dot_general(
        q_ref[...], mem_ref[...],
        dimension_numbers=(((1,), (1,)), ((), ())),
        preferred_element_type=jnp.float32,
    )
    neg_ref[...] = (neg * inv_T).astype(neg_ref.dtype)


def _choose_tile_k(K, M, n_dim, mem_itemsize, out_itemsize,
                   target=16384, min_steps=4,
                   vmem_budget=12 * 1024 * 1024):
    """Largest 128-multiple divisor of K that keeps >= min_steps grid steps
    (v7x megacore + pipelining) and fits a double-buffered VMEM budget
    (safe under v5e's 16 MiB scoped default)."""
    # Double-buffered VMEM bytes per queue row: queue tile row + output row.
    per_row = 2 * (n_dim * mem_itemsize + M * out_itemsize)
    cap = target
    if K >= min_steps * 128:
        cap = min(cap, max(128, K // min_steps))
    cap = min(cap, max(128, (vmem_budget // per_row) // 128 * 128))
    cap = min(cap, K)

    best = None
    for d in range(128, cap + 1, 128):
        if K % d == 0:
            best = d
    if best is None:
        # K not a multiple of 128 (or tiny): a full-extent block is always legal.
        best = K if (K < 128 or K % 128 != 0) else 128
    return best


def moco_neg_logits(lhs, memory, T=0.07, tile_k=None, out_dtype=jnp.float32):
    """neg = (lhs @ memory.T) / T via a Pallas kernel tiled over queue rows."""
    M, n_dim = lhs.shape
    K = memory.shape[0]
    out_itemsize = jnp.dtype(out_dtype).itemsize
    tile_k = _choose_tile_k(
        K, M, n_dim,
        mem_itemsize=jnp.dtype(memory.dtype).itemsize,
        out_itemsize=out_itemsize,
        target=tile_k if tile_k is not None else 16384,
    )

    kernel = functools.partial(_moco_neg_kernel, inv_T=1.0 / T)

    cost = pl.CostEstimate(
        flops=2 * M * K * n_dim,
        transcendentals=0,
        bytes_accessed=(M * n_dim * jnp.dtype(lhs.dtype).itemsize
                        + K * n_dim * jnp.dtype(memory.dtype).itemsize
                        + M * K * out_itemsize),
    )

    neg = pl.pallas_call(
        kernel,
        out_shape=jax.ShapeDtypeStruct((M, K), out_dtype),
        grid_spec=pltpu.PrefetchScalarGridSpec(
            num_scalar_prefetch=0,
            grid=(K // tile_k,),
            in_specs=[
                pl.BlockSpec((M, n_dim), lambda j: (0, 0)),       # lhs (resident)
                pl.BlockSpec((tile_k, n_dim), lambda j: (j, 0)),  # queue tile
            ],
            out_specs=pl.BlockSpec((M, tile_k), lambda j: (0, j)),  # lane-dense
        ),
        # Each step touches disjoint queue/output blocks -> fully parallel
        # (lets v7x shard the K streaming across both TensorCores; ~no-op on
        # single-TC v5e/v6e, which is fine).
        compiler_params=pltpu.CompilerParams(
            dimension_semantics=("parallel",)),
        cost_estimate=cost,
    )(lhs, memory)
    return neg


@functools.partial(jax.jit,
                   static_argnames=("T", "tile_k", "split_logits"),
                   donate_argnums=(2,))
def rgb_moco_forward(q, k, memory, index, q_jig=None, all_k=None, *,
                     T=0.07, tile_k=None, split_logits=False):
    """Functional equivalent of RGBMoCo.forward (q_jig / all_k optional).

    Default (split_logits=False), matching the module:
        (logits[, logits_jig], labels, new_memory, new_index)
        with logits = cat((pos, neg), 1) / T.
    split_logits=True (hot path, avoids the (M, 1+K) concat traffic):
        (pos, [pos_jig,] neg_all, labels, new_memory, new_index)
        where neg_all rows [:bsz] belong to q and [bsz:] to q_jig.
    `memory` is donated so the queue update is an in-place row write.
    """
    bsz = q.shape[0]
    K = memory.shape[0]
    inv_T = 1.0 / T

    # positive logit: bmm(q.view(b,1,d), k.view(b,d,1)) / T -- tiny, plain JAX,
    # kept in fp32.
    kf = k.astype(jnp.float32)
    pos = jnp.sum(q.astype(jnp.float32) * kf, axis=1, keepdims=True) * inv_T
    pos_jig = None
    if q_jig is not None:
        pos_jig = jnp.sum(q_jig.astype(jnp.float32) * kf, axis=1,
                          keepdims=True) * inv_T

    # Fuse q and q_jig into one LHS: the queue is streamed from HBM only once.
    lhs = q if q_jig is None else jnp.concatenate([q, q_jig], axis=0)
    lhs = lhs.astype(memory.dtype)   # bf16 MXU operands when the queue is bf16

    neg_all = moco_neg_logits(lhs, memory, T=T, tile_k=tile_k)

    labels = jnp.zeros((bsz,), dtype=jnp.int32)   # torch.long -> int32 on TPU

    # _update_memory: queue.index_copy_(0, (arange(n)+index) % K, all_k)
    # Contiguous in-place row write on the donated buffer when the pointer
    # does not wrap; general scatter only in the wrap-around case.
    all_k = all_k if all_k is not None else k
    num_neg = all_k.shape[0]
    all_k_rows = all_k.astype(memory.dtype)

    def _no_wrap(mem):
        return lax.dynamic_update_slice_in_dim(mem, all_k_rows, index, axis=0)

    def _wrap(mem):
        out_ids = (jnp.arange(num_neg) + index) % K
        return mem.at[out_ids].set(all_k_rows)

    new_memory = lax.cond(index + num_neg <= K, _no_wrap, _wrap, memory)
    new_index = (index + num_neg) % K

    if split_logits:
        if q_jig is not None:
            return pos, pos_jig, neg_all, labels, new_memory, new_index
        return pos, neg_all, labels, new_memory, new_index

    # cat((pos, neg), dim=1); division by T already fused into the kernel.
    logits = jnp.concatenate([pos, neg_all[:bsz]], axis=1)
    if q_jig is not None:
        logits_jig = jnp.concatenate([pos_jig, neg_all[bsz:]], axis=1)
        return logits, logits_jig, labels, new_memory, new_index
    return logits, labels, new_memory, new_index


def _l2_normalize(x, eps=1e-12):
    # F.normalize(x): x / max(||x||_2, eps) row-wise
    n = jnp.sqrt(jnp.sum(x * x, axis=-1, keepdims=True))
    return x / jnp.maximum(n, eps)


if __name__ == "__main__":
    # Small, TPU-friendly shapes consistent with the module:
    #   feature dim n_dim = 128, queue size K = 2048, batch = 8
    bsz, n_dim, K = 8, 128, 2048
    T = 0.07

    key = jax.random.PRNGKey(0)
    k_mem, k_q, k_k, k_j = jax.random.split(key, 4)

    # RGBMoCo.__init__: memory = F.normalize(torch.randn(K, n_dim)),
    # stored in bf16 (halves the dominant HBM read; MXU accumulates in f32).
    memory = _l2_normalize(
        jax.random.normal(k_mem, (K, n_dim), dtype=jnp.float32)
    ).astype(jnp.bfloat16)
    q = _l2_normalize(jax.random.normal(k_q, (bsz, n_dim), dtype=jnp.float32))
    k = _l2_normalize(jax.random.normal(k_k, (bsz, n_dim), dtype=jnp.float32))
    q_jig = _l2_normalize(jax.random.normal(k_j, (bsz, n_dim), dtype=jnp.float32))
    index = jnp.array(0, dtype=jnp.int32)

    # References, computed BEFORE the call (`memory` is donated).
    mem_f32 = memory.astype(jnp.float32)
    lhs_f32 = jnp.concatenate([q, q_jig], axis=0)
    lhs_bf = lhs_f32.astype(jnp.bfloat16).astype(jnp.float32)
    hi = lax.Precision.HIGHEST
    # Exact reference of the kernel path (bf16 inputs, f32 accumulation).
    neg_bf_ref = jnp.einsum("md,kd->mk", lhs_bf, mem_f32, precision=hi) / T
    # True fp32 math on the stored queue (documents the bf16-lhs approximation).
    neg_f32_ref = jnp.einsum("md,kd->mk", lhs_f32, mem_f32, precision=hi) / T
    pos_ref = jnp.sum(q * k, axis=1, keepdims=True) / T
    pos_jig_ref = jnp.sum(q_jig * k, axis=1, keepdims=True) / T
    logits_ref = jnp.concatenate([pos_ref, neg_bf_ref[:bsz]], axis=1)
    logits_jig_ref = jnp.concatenate([pos_jig_ref, neg_bf_ref[bsz:]], axis=1)
    logits_f32_ref = jnp.concatenate([pos_ref, neg_f32_ref[:bsz]], axis=1)
    expected_rows = k.astype(jnp.bfloat16)
    mem2_ref = mem_f32.at[:bsz].set(expected_rows.astype(jnp.float32))
    neg2_ref = jnp.einsum("md,kd->mk", lhs_bf, mem2_ref, precision=hi) / T

    # --- step 1: default (module-matching) path -----------------------------
    out = rgb_moco_forward(q, k, memory, index, q_jig=q_jig, T=T)
    logits, logits_jig, labels, new_memory, new_index = out
    jax.block_until_ready(out)

    assert logits.shape == (bsz, 1 + K)
    assert logits_jig.shape == (bsz, 1 + K)
    assert labels.shape == (bsz,) and int(labels.sum()) == 0
    # tight: against the exact bf16-input reference
    assert jnp.allclose(logits, logits_ref, atol=2e-3, rtol=2e-3)
    assert jnp.allclose(logits_jig, logits_jig_ref, atol=2e-3, rtol=2e-3)
    # loose: against true fp32 math (bf16 queue/lhs ~1e-2 abs after /T)
    assert jnp.allclose(logits, logits_f32_ref, atol=8e-2)
    assert jnp.array_equal(new_memory[:bsz], expected_rows)
    assert int(new_index) == bsz

    # --- step 2: split_logits hot path (no concat), reusing updated queue ---
    out2 = rgb_moco_forward(q, k, new_memory, new_index, q_jig=q_jig, T=T,
                            split_logits=True)
    pos2, pos_jig2, neg2, labels2, new_memory2, new_index2 = out2
    jax.block_until_ready(out2)

    assert neg2.shape == (2 * bsz, K)
    assert jnp.allclose(neg2, neg2_ref, atol=2e-3, rtol=2e-3)
    assert jnp.allclose(pos2, pos_ref, atol=2e-3, rtol=2e-3)
    assert jnp.allclose(pos_jig2, pos_jig_ref, atol=2e-3, rtol=2e-3)
    assert jnp.array_equal(new_memory2[bsz:2 * bsz], expected_rows)
    assert int(new_index2) == 2 * bsz

    print("KERNEL_OK")
</pallas_src>

<mosaic_0001>
module attributes {stable_mosaic.version = 11 : i64} {
  func.func @_moco_neg_kernel(%arg0: i32, %arg1: memref<16x128xbf16, #tpu.memory_space<vmem>>, %arg2: memref<512x128xbf16, #tpu.memory_space<vmem>>, %arg3: memref<16x512xf32, #tpu.memory_space<vmem>>) attributes {dimension_semantics = [#tpu.dimension_semantics<parallel>], iteration_bounds = array<i64: 4>, scalar_prefetch = 0 : i64, scratch_operands = 0 : i64, tpu.core_type = #tpu.core_type<tc>, window_params = [{pipeline_mode = #tpu.pipeline_mode<synchronous>, transform_indices = @transform_0, window_bounds = array<i64: 16, 128>}, {transform_indices = @transform_1, window_bounds = array<i64: 512, 128>}, {transform_indices = @transform_2, window_bounds = array<i64: 16, 512>}]} {
    %c0 = arith.constant 0 : index
    %c0_0 = arith.constant 0 : index
    %0 = vector.load %arg1[%c0, %c0_0] : memref<16x128xbf16, #tpu.memory_space<vmem>>, vector<16x128xbf16>
    %c0_1 = arith.constant 0 : index
    %c0_2 = arith.constant 0 : index
    %1 = vector.load %arg2[%c0_1, %c0_2] : memref<512x128xbf16, #tpu.memory_space<vmem>>, vector<512x128xbf16>
    %cst = arith.constant dense<0.000000e+00> : vector<16x512xf32>
    %2 = tpu.matmul %0, %1, %cst {dimension_numbers = #tpu.dot_dimension_numbers<[1], [1], [0], [0], [0, 0, 1, 0], [], []>} : vector<16x128xbf16>, vector<512x128xbf16>, vector<16x512xf32> -> vector<16x512xf32>
    %cst_3 = arith.constant 14.2857141 : f32
    %3 = vector.broadcast %cst_3 : f32 to vector<16x512xf32>
    %4 = arith.mulf %2, %3 : vector<16x512xf32>
    %c0_4 = arith.constant 0 : index
    %c0_5 = arith.constant 0 : index
    %5 = vector.load %arg3[%c0_4, %c0_5] : memref<16x512xf32, #tpu.memory_space<vmem>>, vector<16x512xf32>
    tpu.vector_store %arg3[%c0_4, %c0_5], %4 {strides = array<i32>} : memref<16x512xf32, #tpu.memory_space<vmem>>, vector<16x512xf32>,
    return
  }
  func.func @transform_0(%arg0: i32) -> (i32, i32) {
    %c0_i32 = arith.constant 0 : i32
    %c0_i32_0 = arith.constant 0 : i32
    %c0_i32_1 = arith.constant 0 : i32
    return %c0_i32, %c0_i32_0 : i32, i32
  }
  func.func @transform_1(%arg0: i32) -> (i32, i32) {
    %c0_i32 = arith.constant 0 : i32
    %c0_i32_0 = arith.constant 0 : i32
    return %arg0, %c0_i32 : i32, i32
  }
  func.func @transform_2(%arg0: i32) -> (i32, i32) {
    %c0_i32 = arith.constant 0 : i32
    %c0_i32_0 = arith.constant 0 : i32
    return %c0_i32, %arg0 : i32, i32
  }
}

</mosaic_0001>

<llo_original>
// kernel: rgb_moco_forward.1
$region0: #{rgb_moco_forward.1}
  #allocation0 [shape = 'u32[]', space=smem, size = 0x4, offset = 0x4, fixed_abs, tag = 'smem constant byte address 0x4 - core index']
  #allocation1 [shape = 'u32[144,128]{1,0:T(1,128)}', space=vmem, size = 0x12000, scoped, tag = 'internal scratch']
  %s0 = inlined_call_operand.vmem [shape: bf16[16,128], index: 0, kind: input, shape index: {}]
  %s1 = inlined_call_operand.hbm [shape: bf16[2048,128], index: 1, kind: input, shape index: {}]
  %s2 = inlined_call_operand.vmem [shape: f32[16,2048], index: 2, kind: output, shape index: {}]
  %s3 = sld [smem:[#allocation0]]
  $region64: #{rgb_moco_forward.1} parent=0
    _
  %s5 = ssub.s32 1, %s3
  %s6 = scalar_select 0, %s5, %s3
  $region1: #{rgb_moco_forward.1} parent=0
    #allocation2 [shape = 'u8[262144]{0}', space=vmem, size = 0x40000, scoped, tag = 'input window, operand 1']
    #allocation3 [shape = 's32[2]{0}', space=sflag, size = 0x8, scoped, tag = 'scoped memory for rgb_moco_forward.1']
    #allocation4 [shape = 'u8[65536]{0}', space=vmem, size = 0x10000, scoped, tag = 'output window, operand 0']
    %7 = vsyncpa [#allocation3], 0
    %s8 = scalar_lea.sflag [#allocation3], 1
    %9 = vsyncpa %s8, 0
    loop: start=0, step=1, limit=6
    $region2: #{rgb_moco_forward.1} parent=1 // loop_pre_header
      _
    $region3: #{rgb_moco_forward.1} parent=1 // loop_header
      %s11 = sphi 0, %s15
      %p12 = scmp.ge.s32.totalorder %s11, 6
      %s19 = sphi 0, %s19
      %s21 = sphi 0, %s19
      %s22 = sphi 0, %s21
      %s36 = sphi 0, %s22
      %s42 = sphi 0, %s44
      %s45 = sphi 0, %s42
      %s46 = sphi 0, %s45
      %s62 = sphi 0, %s46
      %s68 = sphi 0, %s70
      %s71 = sphi 0, %s68
      %s72 = sphi 0, %s71
      %s88 = sphi 0, %s72
    $region4: #{rgb_moco_forward.1} parent=1 // loop_header_branch
      %14 = sbr.rel (%p12) target = $region8
    $region5: #{rgb_moco_forward.1} parent=1 // loop_body
      %s16 = ssub.s32 %s11, 1
      %s17 = ssub.s32 %s11, 2
      %s18 = sadd.s32 %s11, 1
      %s20 = sadd.s32 %s19, 1
      %p23 = scmp.eq.s32.totalorder %s11, 3
      %p24 = scmp.ne.s32.totalorder %s19, %s21
      %p25 = scmp.eq.s32.totalorder %s11, 0
      %p26 = por %p24, %p25
      %p27 = scmp.ne.s32.totalorder %s19, %s21
      %p28 = scmp.eq.s32.totalorder %s16, 3
      %p29 = por %p27, %p28
      %p30 = scmp.ne.s32.totalorder %s21, %s22
      %p31 = scmp.eq.s32.totalorder %s16, 0
      %p32 = por %p30, %p31
      %p33 = scmp.ne.s32.totalorder %s21, %s22
      %p34 = scmp.eq.s32.totalorder %s17, 3
      %p35 = por %p33, %p34
      %p37 = scmp.ne.s32.totalorder %s22, %s36
      %p38 = scmp.eq.s32.totalorder %s17, 0
      %p39 = por %p37, %p38
      %s40 = ssub.s32 %s11, %s18
      %p41 = scmp.eq.s32.totalorder %s40, 0
      %s43 = sadd.s32 %s42, 1
      %s44 = scalar_select %p41, %s42, %s43
      %p47 = pneg %p41
      %p48 = scmp.eq.s32.totalorder %s11, 3
      %p49 = por %p47, %p48
      %p50 = scmp.ne.s32.totalorder %s42, %s45
      %p51 = scmp.eq.s32.totalorder %s11, 0
      %p52 = por %p50, %p51
      %p53 = scmp.ne.s32.totalorder %s42, %s45
      %p54 = scmp.eq.s32.totalorder %s16, 3
      %p55 = por %p53, %p54
      %p56 = scmp.ne.s32.totalorder %s45, %s46
      %p57 = scmp.eq.s32.totalorder %s16, 0
      %p58 = por %p56, %p57
      %p59 = scmp.ne.s32.totalorder %s45, %s46
      %p60 = scmp.eq.s32.totalorder %s17, 3
      %p61 = por %p59, %p60
      %p63 = scmp.ne.s32.totalorder %s46, %s62
      %p64 = scmp.eq.s32.totalorder %s17, 0
      %p65 = por %p63, %p64
      %s66 = ssub.s32 %s11, %s18
      %p67 = scmp.eq.s32.totalorder %s66, 0
      %s69 = sadd.s32 %s68, 1
      %s70 = scalar_select %p67, %s68, %s69
      %p73 = pneg %p67
      %p74 = scmp.eq.s32.totalorder %s11, 3
      %p75 = por %p73, %p74
      %p76 = scmp.ne.s32.totalorder %s68, %s71
      %p77 = scmp.eq.s32.totalorder %s11, 0
      %p78 = por %p76, %p77
      %p79 = scmp.ne.s32.totalorder %s68, %s71
      %p80 = scmp.eq.s32.totalorder %s16, 3
      %p81 = por %p79, %p80
      %p82 = scmp.ne.s32.totalorder %s71, %s72
      %p83 = scmp.eq.s32.totalorder %s16, 0
      %p84 = por %p82, %p83
      %p85 = scmp.ne.s32.totalorder %s71, %s72
      %p86 = scmp.eq.s32.totalorder %s17, 3
      %p87 = por %p85, %p86
      %p89 = scmp.ne.s32.totalorder %s72, %s88
      %p90 = scmp.eq.s32.totalorder %s17, 0
      %p91 = por %p89, %p90
      %p92 = scmp.le.s32.totalorder 1, %s11
      %p93 = scmp.lt.s32.totalorder %s11, 5
      %p94 = pnand %p92, %p93
      %p95 = pneg %p94
      // Predicated region
      $region9: #{rgb_moco_forward.1} parent=5 // pred_check
        _
      $region10: #{rgb_moco_forward.1} parent=5 // pred_check_branch
        %97 = sbr.rel (%p94) target = $region12
      $region11: #{rgb_moco_forward.1} parent=5 // pred_region
        %s98 = ssub.s32 %s11, 1
        // Predicated region
        $region13: #{rgb_moco_forward.1} parent=11 // pred_check
          %p99 = pneg %p32
        $region14: #{rgb_moco_forward.1} parent=11 // pred_check_branch
          %101 = sbr.rel (%p99) target = $region16
        $region15: #{rgb_moco_forward.1} parent=11 // pred_region
          _
        $region16: #{rgb_moco_forward.1} parent=11 // pred_fallthru
          _
      $region12: #{rgb_moco_forward.1} parent=5 // pred_fallthru
        _
      %p102 = scmp.lt.s32.totalorder %s11, 4
      // Predicated region
      $region17: #{rgb_moco_forward.1} parent=5 // pred_check
        %p103 = pneg %p102
      $region18: #{rgb_moco_forward.1} parent=5 // pred_check_branch
        %105 = sbr.rel (%p103) target = $region20
      $region19: #{rgb_moco_forward.1} parent=5 // pred_region
        // Predicated region
        $region21: #{rgb_moco_forward.1} parent=19 // pred_check
          %p106 = pneg %p52
        $region22: #{rgb_moco_forward.1} parent=19 // pred_check_branch
          %108 = sbr.rel (%p106) target = $region24
        $region23: #{rgb_moco_forward.1} parent=19 // pred_region
          %s109 = sand.u32 %s42, 1
          %s110 = scalar_lea.sflag [#allocation3], %s109
          %s111 = sand.u32 %s42, 1
          %s112 = smul.addr %s111, 256
          %s113 = scalar_lea.vmem [#allocation2], %s112
          %s114 = smul.u32 64, %s11
          %s116 = ssub.s32 4096, 4096
          %117 = vsyncadd %s110, %s116
          %s118 = smul.addr %s114, 64
          %s119 = scalar_lea.hbm %s1, %s118
          %s120 = sshll.u32 %s113, 4
          %s121 = int_to_ptr.vmem [resolvable:$true] %s120
          %126 = dma.hbm_to_vmem [thread:$0]  %s119, 4096, %s121, %s110, 64, 64, 4
        $region24: #{rgb_moco_forward.1} parent=19 // pred_fallthru
          _
      $region20: #{rgb_moco_forward.1} parent=5 // pred_fallthru
        _
      %p127 = scmp.le.s32.totalorder 1, %s11
      %p128 = scmp.lt.s32.totalorder %s11, 5
      %p129 = pnand %p127, %p128
      %p130 = pneg %p129
      // Predicated region
      $region25: #{rgb_moco_forward.1} parent=5 // pred_check
        _
      $region26: #{rgb_moco_forward.1} parent=5 // pred_check_branch
        %132 = sbr.rel (%p129) target = $region28
      $region27: #{rgb_moco_forward.1} parent=5 // pred_region
        %s133 = ssub.s32 %s11, 1
        %s134 = sand.u32 %s45, 1
        %s135 = scalar_lea.sflag [#allocation3], %s134
        %s136 = sand.u32 %s45, 1
        %s137 = smul.addr %s136, 256
        %s138 = scalar_lea.vmem [#allocation2], %s137
        // Predicated region
        $region29: #{rgb_moco_forward.1} parent=27 // pred_check
          %p139 = pneg %p58
        $region30: #{rgb_moco_forward.1} parent=27 // pred_check_branch
          %141 = sbr.rel (%p139) target = $region32
        $region31: #{rgb_moco_forward.1} parent=27 // pred_region
          %142 = dma.done %s135, 4096
        $region32: #{rgb_moco_forward.1} parent=27 // pred_fallthru
          _
        %p143 = pneg %p32
        %p144 = pneg %p29
        %s145 = sand.u32 %s45, 1
        %s146 = scalar_lea.sflag [#allocation3], %s145
        %s147 = sand.u32 %s45, 1
        %s148 = smul.addr %s147, 256
        %s149 = scalar_lea.vmem [#allocation2], %s148
        %p150 = pneg %p58
        %p151 = pneg %p55
        %p152 = pneg %p84
        %p153 = pneg %p81
        %s154 = sand.u32 %s71, 1
        %s155 = sand.u32 %s71, 1
        %s156 = smul.addr %s155, 64
        %s157 = scalar_lea.vmem [#allocation4], %s156
        %s158 = smul.u32 64, %s16
        %s159 = smul.u32 4, %s16
        %v161 = vld [vmem:[%s0] sm:$0xf]
        %v162 = vld [vmem:[%s0 + $0x4] sm:$0xf]
        %v163 = vld [vmem:[%s138] sm:$0xf]
        %v164 = vld [vmem:[%s138 + $0x4] sm:$0xf]
        %v165 = vld [vmem:[%s138 + $0x8] sm:$0xf]
        %v166 = vld [vmem:[%s138 + $0xc] sm:$0xf]
        %v167 = vld [vmem:[%s138 + $0x10] sm:$0xf]
        %v168 = vld [vmem:[%s138 + $0x14] sm:$0xf]
        %v169 = vld [vmem:[%s138 + $0x18] sm:$0xf]
        %v170 = vld [vmem:[%s138 + $0x1c] sm:$0xf]
        %v171 = vld [vmem:[%s138 + $0x20] sm:$0xf]
        %v172 = vld [vmem:[%s138 + $0x24] sm:$0xf]
        %v173 = vld [vmem:[%s138 + $0x28] sm:$0xf]
        %v174 = vld [vmem:[%s138 + $0x2c] sm:$0xf]
        %v175 = vld [vmem:[%s138 + $0x30] sm:$0xf]
        %v176 = vld [vmem:[%s138 + $0x34] sm:$0xf]
        %v177 = vld [vmem:[%s138 + $0x38] sm:$0xf]
        %v178 = vld [vmem:[%s138 + $0x3c] sm:$0xf]
        %v179 = vld [vmem:[%s138 + $0x40] sm:$0xf]
        %v180 = vld [vmem:[%s138 + $0x44] sm:$0xf]
        %v181 = vld [vmem:[%s138 + $0x48] sm:$0xf]
        %v182 = vld [vmem:[%s138 + $0x4c] sm:$0xf]
        %v183 = vld [vmem:[%s138 + $0x50] sm:$0xf]
        %v184 = vld [vmem:[%s138 + $0x54] sm:$0xf]
        %v185 = vld [vmem:[%s138 + $0x58] sm:$0xf]
        %v186 = vld [vmem:[%s138 + $0x5c] sm:$0xf]
        %v187 = vld [vmem:[%s138 + $0x60] sm:$0xf]
        %v188 = vld [vmem:[%s138 + $0x64] sm:$0xf]
        %v189 = vld [vmem:[%s138 + $0x68] sm:$0xf]
        %v190 = vld [vmem:[%s138 + $0x6c] sm:$0xf]
        %v191 = vld [vmem:[%s138 + $0x70] sm:$0xf]
        %v192 = vld [vmem:[%s138 + $0x74] sm:$0xf]
        %v193 = vld [vmem:[%s138 + $0x78] sm:$0xf]
        %v194 = vld [vmem:[%s138 + $0x7c] sm:$0xf]
        %v195 = vld [vmem:[%s138 + $0x80] sm:$0xf]
        %v196 = vld [vmem:[%s138 + $0x84] sm:$0xf]
        %v197 = vld [vmem:[%s138 + $0x88] sm:$0xf]
        %v198 = vld [vmem:[%s138 + $0x8c] sm:$0xf]
        %v199 = vld [vmem:[%s138 + $0x90] sm:$0xf]
        %v200 = vld [vmem:[%s138 + $0x94] sm:$0xf]
        %v201 = vld [vmem:[%s138 + $0x98] sm:$0xf]
        %v202 = vld [vmem:[%s138 + $0x9c] sm:$0xf]
        %v203 = vld [vmem:[%s138 + $0xa0] sm:$0xf]
        %v204 = vld [vmem:[%s138 + $0xa4] sm:$0xf]
        %v205 = vld [vmem:[%s138 + $0xa8] sm:$0xf]
        %v206 = vld [vmem:[%s138 + $0xac] sm:$0xf]
        %v207 = vld [vmem:[%s138 + $0xb0] sm:$0xf]
        %v208 = vld [vmem:[%s138 + $0xb4] sm:$0xf]
        %v209 = vld [vmem:[%s138 + $0xb8] sm:$0xf]
        %v210 = vld [vmem:[%s138 + $0xbc] sm:$0xf]
        %v211 = vld [vmem:[%s138 + $0xc0] sm:$0xf]
        %v212 = vld [vmem:[%s138 + $0xc4] sm:$0xf]
        %v213 = vld [vmem:[%s138 + $0xc8] sm:$0xf]
        %v214 = vld [vmem:[%s138 + $0xcc] sm:$0xf]
        %v215 = vld [vmem:[%s138 + $0xd0] sm:$0xf]
        %v216 = vld [vmem:[%s138 + $0xd4] sm:$0xf]
        %v217 = vld [vmem:[%s138 + $0xd8] sm:$0xf]
        %v218 = vld [vmem:[%s138 + $0xdc] sm:$0xf]
        %v219 = vld [vmem:[%s138 + $0xe0] sm:$0xf]
        %v220 = vld [vmem:[%s138 + $0xe4] sm:$0xf]
        %v221 = vld [vmem:[%s138 + $0xe8] sm:$0xf]
        %v222 = vld [vmem:[%s138 + $0xec] sm:$0xf]
        %v223 = vld [vmem:[%s138 + $0xf0] sm:$0xf]
        %v224 = vld [vmem:[%s138 + $0xf4] sm:$0xf]
        %v225 = vld [vmem:[%s138 + $0xf8] sm:$0xf]
        %v226 = vld [vmem:[%s138 + $0xfc] sm:$0xf]
        %v229 = vunpack.c.l.b16 %v161
        %v230 = vunpack.c.l.b16 %v162
        %v231 = vpack.c.b16 %v230, %v229
        %v297 = vunpack.c.l.b16 %v163
        %v298 = vunpack.c.l.b16 %v164
        %v299 = vunpack.c.l.b16 %v165
        %v300 = vunpack.c.l.b16 %v166
        %v301 = vunpack.c.l.b16 %v167
        %v302 = vunpack.c.l.b16 %v168
        %v303 = vunpack.c.l.b16 %v169
        %v304 = vunpack.c.l.b16 %v170
        %v305 = vunpack.c.l.b16 %v171
        %v306 = vunpack.c.l.b16 %v172
        %v307 = vunpack.c.l.b16 %v173
        %v308 = vunpack.c.l.b16 %v174
        %v309 = vunpack.c.l.b16 %v175
        %v310 = vunpack.c.l.b16 %v176
        %v311 = vunpack.c.l.b16 %v177
        %v312 = vunpack.c.l.b16 %v178
        %v313 = vunpack.c.l.b16 %v179
        %v314 = vunpack.c.l.b16 %v180
        %v315 = vunpack.c.l.b16 %v181
        %v316 = vunpack.c.l.b16 %v182
        %v317 = vunpack.c.l.b16 %v183
        %v318 = vunpack.c.l.b16 %v184
        %v319 = vunpack.c.l.b16 %v185
        %v320 = vunpack.c.l.b16 %v186
        %v321 = vunpack.c.l.b16 %v187
        %v322 = vunpack.c.l.b16 %v188
        %v323 = vunpack.c.l.b16 %v189
        %v324 = vunpack.c.l.b16 %v190
        %v325 = vunpack.c.l.b16 %v191
        %v326 = vunpack.c.l.b16 %v192
        %v327 = vunpack.c.l.b16 %v193
        %v328 = vunpack.c.l.b16 %v194
        %v329 = vunpack.c.l.b16 %v195
        %v330 = vunpack.c.l.b16 %v196
        %v331 = vunpack.c.l.b16 %v197
        %v332 = vunpack.c.l.b16 %v198
        %v333 = vunpack.c.l.b16 %v199
        %v334 = vunpack.c.l.b16 %v200
        %v335 = vunpack.c.l.b16 %v201
        %v336 = vunpack.c.l.b16 %v202
        %v337 = vunpack.c.l.b16 %v203
        %v338 = vunpack.c.l.b16 %v204
        %v339 = vunpack.c.l.b16 %v205
        %v340 = vunpack.c.l.b16 %v206
        %v341 = vunpack.c.l.b16 %v207
        %v342 = vunpack.c.l.b16 %v208
        %v343 = vunpack.c.l.b16 %v209
        %v344 = vunpack.c.l.b16 %v210
        %v345 = vunpack.c.l.b16 %v211
        %v346 = vunpack.c.l.b16 %v212
        %v347 = vunpack.c.l.b16 %v213
        %v348 = vunpack.c.l.b16 %v214
        %v349 = vunpack.c.l.b16 %v215
        %v350 = vunpack.c.l.b16 %v216
        %v351 = vunpack.c.l.b16 %v217
        %v352 = vunpack.c.l.b16 %v218
        %v353 = vunpack.c.l.b16 %v219
        %v354 = vunpack.c.l.b16 %v220
        %v355 = vunpack.c.l.b16 %v221
        %v356 = vunpack.c.l.b16 %v222
        %v357 = vunpack.c.l.b16 %v223
        %v358 = vunpack.c.l.b16 %v224
        %v359 = vunpack.c.l.b16 %v225
        %v360 = vunpack.c.l.b16 %v226
        %v361 = vpack.c.b16 %v298, %v297
        %v362 = vpack.c.b16 %v300, %v299
        %v363 = vpack.c.b16 %v302, %v301
        %v364 = vpack.c.b16 %v304, %v303
        %v365 = vpack.c.b16 %v306, %v305
        %v366 = vpack.c.b16 %v308, %v307
        %v367 = vpack.c.b16 %v310, %v309
        %v368 = vpack.c.b16 %v312, %v311
        %v369 = vpack.c.b16 %v314, %v313
        %v370 = vpack.c.b16 %v316, %v315
        %v371 = vpack.c.b16 %v318, %v317
        %v372 = vpack.c.b16 %v320, %v319
        %v373 = vpack.c.b16 %v322, %v321
        %v374 = vpack.c.b16 %v324, %v323
        %v375 = vpack.c.b16 %v326, %v325
        %v376 = vpack.c.b16 %v328, %v327
        %v377 = vpack.c.b16 %v330, %v329
        %v378 = vpack.c.b16 %v332, %v331
        %v379 = vpack.c.b16 %v334, %v333
        %v380 = vpack.c.b16 %v336, %v335
        %v381 = vpack.c.b16 %v338, %v337
        %v382 = vpack.c.b16 %v340, %v339
        %v383 = vpack.c.b16 %v342, %v341
        %v384 = vpack.c.b16 %v344, %v343
        %v385 = vpack.c.b16 %v346, %v345
        %v386 = vpack.c.b16 %v348, %v347
        %v387 = vpack.c.b16 %v350, %v349
        %v388 = vpack.c.b16 %v352, %v351
        %v389 = vpack.c.b16 %v354, %v353
        %v390 = vpack.c.b16 %v356, %v355
        %v391 = vpack.c.b16 %v358, %v357
        %v392 = vpack.c.b16 %v360, %v359
        %425 = vmatprep.subr.bf16.mxu0 0
        %426 = vmatpush1.bf16.xpose.msra.mxu0 %v368
        %427 = vmatprep.subr.bf16.mxu0 0
        %428 = vmatpush1.bf16.xpose.msra.mxu0 %v367
        %429 = vmatprep.subr.bf16.mxu0 0
        %430 = vmatpush1.bf16.xpose.msra.mxu0 %v366
        %431 = vmatprep.subr.bf16.mxu0 0
        %432 = vmatpush1.bf16.xpose.msra.mxu0 %v365
        %433 = vmatprep.subr.bf16.mxu0 0
        %434 = vmatpush1.bf16.xpose.msra.mxu0 %v364
        %435 = vmatprep.subr.bf16.mxu0 0
        %436 = vmatpush1.bf16.xpose.msra.mxu0 %v363
        %437 = vmatprep.subr.bf16.mxu0 0
        %438 = vmatpush1.bf16.xpose.msra.mxu0 %v362
        %439 = vmatprep.subr.bf16.mxu0 0
        %440 = vmatpush1.bf16.xpose.msra.mxu0 %v361
        %441 = vmatprep.subr.bf16.mxu0 0
        %442 = vmatpush2.bf16.xpose.msra.mxu0 %v376
        %443 = vmatprep.subr.bf16.mxu0 0
        %444 = vmatpush2.bf16.xpose.msra.mxu0 %v375
        %445 = vmatprep.subr.bf16.mxu0 0
        %446 = vmatpush2.bf16.xpose.msra.mxu0 %v374
        %447 = vmatprep.subr.bf16.mxu0 0
        %448 = vmatpush2.bf16.xpose.msra.mxu0 %v373
        %449 = vmatprep.subr.bf16.mxu0 0
        %450 = vmatpush2.bf16.xpose.msra.mxu0 %v372
        %451 = vmatprep.subr.bf16.mxu0 0
        %452 = vmatpush2.bf16.xpose.msra.mxu0 %v371
        %453 = vmatprep.subr.bf16.mxu0 0
        %454 = vmatpush2.bf16.xpose.msra.mxu0 %v370
        %455 = vmatprep.subr.bf16.mxu0 0
        %456 = vmatpush2.bf16.xpose.msra.mxu0 %v369
        %457 = vmatprep.mubr.bf16.mxu0 0
        %458 = vmatmul.mubr.bf16.gmra.mxu0 %v231
        %v459 = vpop.f32.mrf.mxu0
        %v460 = vadd.f32 0.0, %v459
        %v461 = vpop.f32.mrf.mxu0
        %v462 = vadd.f32 0.0, %v461
        %v463 = vpop.f32.mrf.mxu0
        %v464 = vadd.f32 0.0, %v463
        %v465 = vpop.f32.mrf.mxu0
        %v466 = vadd.f32 0.0, %v465
        %467 = vdwg.mxu0
        %468 = vmatprep.subr.bf16.mxu0 0
        %469 = vmatpush1.bf16.xpose.msra.mxu0 %v384
        %470 = vmatprep.subr.bf16.mxu0 0
        %471 = vmatpush1.bf16.xpose.msra.mxu0 %v383
        %472 = vmatprep.subr.bf16.mxu0 0
        %473 = vmatpush1.bf16.xpose.msra.mxu0 %v382
        %474 = vmatprep.subr.bf16.mxu0 0
        %475 = vmatpush1.bf16.xpose.msra.mxu0 %v381
        %476 = vmatprep.subr.bf16.mxu0 0
        %477 = vmatpush1.bf16.xpose.msra.mxu0 %v380
        %478 = vmatprep.subr.bf16.mxu0 0
        %479 = vmatpush1.bf16.xpose.msra.mxu0 %v379
        %480 = vmatprep.subr.bf16.mxu0 0
        %481 = vmatpush1.bf16.xpose.msra.mxu0 %v378
        %482 = vmatprep.subr.bf16.mxu0 0
        %483 = vmatpush1.bf16.xpose.msra.mxu0 %v377
        %484 = vmatprep.subr.bf16.mxu0 0
        %485 = vmatpush2.bf16.xpose.msra.mxu0 %v392
        %486 = vmatprep.subr.bf16.mxu0 0
        %487 = vmatpush2.bf16.xpose.msra.mxu0 %v391
        %488 = vmatprep.subr.bf16.mxu0 0
        %489 = vmatpush2.bf16.xpose.msra.mxu0 %v390
        %490 = vmatprep.subr.bf16.mxu0 0
        %491 = vmatpush2.bf16.xpose.msra.mxu0 %v389
        %492 = vmatprep.subr.bf16.mxu0 0
        %493 = vmatpush2.bf16.xpose.msra.mxu0 %v388
        %494 = vmatprep.subr.bf16.mxu0 0
        %495 = vmatpush2.bf16.xpose.msra.mxu0 %v387
        %496 = vmatprep.subr.bf16.mxu0 0
        %497 = vmatpush2.bf16.xpose.msra.mxu0 %v386
        %498 = vmatprep.subr.bf16.mxu0 0
        %499 = vmatpush2.bf16.xpose.msra.mxu0 %v385
        %500 = vmatprep.mubr.bf16.mxu0 0
        %501 = vmatmul.mubr.bf16.gmra.mxu0 %v231
        %v502 = vpop.f32.mrf.mxu0
        %v503 = vadd.f32 0.0, %v502
        %v504 = vpop.f32.mrf.mxu0
        %v505 = vadd.f32 0.0, %v504
        %v506 = vpop.f32.mrf.mxu0
        %v507 = vadd.f32 0.0, %v506
        %v508 = vpop.f32.mrf.mxu0
        %v509 = vadd.f32 0.0, %v508
        %510 = vdwg.mxu0
        %v511 = vmul.f32 %v460, 14.285714
        %v512 = vmul.f32 %v462, 14.285714
        %v513 = vmul.f32 %v503, 14.285714
        %v514 = vmul.f32 %v505, 14.285714
        %v515 = vmul.f32 %v464, 14.285714
        %v516 = vmul.f32 %v466, 14.285714
        %v517 = vmul.f32 %v507, 14.285714
        %v518 = vmul.f32 %v509, 14.285714
        %519 = vst [vmem:[%s157] sm:$0xff] %v511
        %520 = vst [vmem:[%s157 + $0x8] sm:$0xff] %v512
        %521 = vst [vmem:[%s157 + $0x10] sm:$0xff] %v513
        %522 = vst [vmem:[%s157 + $0x18] sm:$0xff] %v514
        %523 = vst [vmem:[%s157 + $0x20] sm:$0xff] %v515
        %524 = vst [vmem:[%s157 + $0x28] sm:$0xff] %v516
        %525 = vst [vmem:[%s157 + $0x30] sm:$0xff] %v517
        %526 = vst [vmem:[%s157 + $0x38] sm:$0xff] %v518
        %s527 = sand.u32 %s71, 1
        %s528 = sand.u32 %s71, 1
        %s529 = smul.addr %s528, 64
        %s530 = scalar_lea.vmem [#allocation4], %s529
        // Predicated region
        $region33: #{rgb_moco_forward.1} parent=27 // pred_check
          %p531 = pneg %p81
        $region34: #{rgb_moco_forward.1} parent=27 // pred_check_branch
          %533 = sbr.rel (%p531) target = $region36
        $region35: #{rgb_moco_forward.1} parent=27 // pred_region
          %s534 = smul.u32 4, %s16
          %s535 = smul.addr %s534, 8
          %s536 = scalar_lea.vmem %s2, %s535
          // Predicated region
          $region37: #{rgb_moco_forward.1} parent=35 // pred_check
            _
          $region38: #{rgb_moco_forward.1} parent=35 // pred_check_branch
            %538 = sbr.rel (0) target = $region40
          $region39: #{rgb_moco_forward.1} parent=35 // pred_region
            // Predicated region
            $region41: #{rgb_moco_forward.1} parent=39 // pred_check
              _
            $region42: #{rgb_moco_forward.1} parent=39 // pred_check_branch
              %540 = sbr.rel (0) target = $region44
            $region43: #{rgb_moco_forward.1} parent=39 // pred_region
              loop: start=0, step=1, limit=1
              $region45: #{rgb_moco_forward.1} parent=43 // loop_pre_header
                _
              $region46: #{rgb_moco_forward.1} parent=43 // loop_header
                %s542 = sphi 0, %s546
                %p543 = scmp.ge.s32.totalorder %s542, 1
                %s547 = sphi %s530, %s530
                %s548 = sphi %s536, %s536
              $region47: #{rgb_moco_forward.1} parent=43 // loop_header_branch
                %545 = sbr.rel (%p543) target = $region51
              $region48: #{rgb_moco_forward.1} parent=43 // loop_body
                %v549 = vld [vmem:[%s547] sm:$0xff]
                %550 = vst [vmem:[%s548] sm:$0xff] %v549
                %v551 = vld [vmem:[%s547 + $0x8] sm:$0xff]
                %552 = vst [vmem:[%s548 + $0x8] sm:$0xff] %v551
                %v553 = vld [vmem:[%s547 + $0x10] sm:$0xff]
                %554 = vst [vmem:[%s548 + $0x10] sm:$0xff] %v553
                %v555 = vld [vmem:[%s547 + $0x18] sm:$0xff]
                %556 = vst [vmem:[%s548 + $0x18] sm:$0xff] %v555
                %v557 = vld [vmem:[%s547 + $0x20] sm:$0xff]
                %558 = vst [vmem:[%s548 + $0x80] sm:$0xff] %v557
                %v559 = vld [vmem:[%s547 + $0x28] sm:$0xff]
                %560 = vst [vmem:[%s548 + $0x88] sm:$0xff] %v559
                %v561 = vld [vmem:[%s547 + $0x30] sm:$0xff]
                %562 = vst [vmem:[%s548 + $0x90] sm:$0xff] %v561
                %v563 = vld [vmem:[%s547 + $0x38] sm:$0xff]
                %564 = vst [vmem:[%s548 + $0x98] sm:$0xff] %v563
              $region49: #{rgb_moco_forward.1} parent=43 // loop_footer
                %s546 = sadd.s32 1, %s542
              $region50: #{rgb_moco_forward.1} parent=43 // loop_footer_branch
                %541 = sbr.rel target = $region46
              $region51: #{rgb_moco_forward.1} parent=43 // loop_exit
                _
            $region44: #{rgb_moco_forward.1} parent=39 // pred_fallthru
              _
            // Predicated region
            $region52: #{rgb_moco_forward.1} parent=39 // pred_check
              _
            $region53: #{rgb_moco_forward.1} parent=39 // pred_check_branch
              %566 = sbr.rel target = $region55
            $region54: #{rgb_moco_forward.1} parent=39 // pred_region
              _
            $region55: #{rgb_moco_forward.1} parent=39 // pred_fallthru
              _
          $region40: #{rgb_moco_forward.1} parent=35 // pred_fallthru
            _
          %567 = vnop
        $region36: #{rgb_moco_forward.1} parent=27 // pred_fallthru
          _
      $region28: #{rgb_moco_forward.1} parent=5 // pred_fallthru
        _
      %p568 = scmp.le.s32.totalorder 2, %s11
      // Predicated region
      $region56: #{rgb_moco_forward.1} parent=5 // pred_check
        %p569 = pneg %p568
      $region57: #{rgb_moco_forward.1} parent=5 // pred_check_branch
        %571 = sbr.rel (%p569) target = $region59
      $region58: #{rgb_moco_forward.1} parent=5 // pred_region
        %s572 = ssub.s32 %s11, 2
        // Predicated region
        $region60: #{rgb_moco_forward.1} parent=58 // pred_check
          %p573 = pneg %p87
        $region61: #{rgb_moco_forward.1} parent=58 // pred_check_branch
          %575 = sbr.rel (%p573) target = $region63
        $region62: #{rgb_moco_forward.1} parent=58 // pred_region
          %s576 = sand.u32 %s72, 1
          %s577 = sand.u32 %s72, 1
          %s578 = smul.addr %s577, 64
          %s579 = scalar_lea.vmem [#allocation4], %s578
        $region63: #{rgb_moco_forward.1} parent=58 // pred_fallthru
          _
      $region59: #{rgb_moco_forward.1} parent=5 // pred_fallthru
        _
    $region6: #{rgb_moco_forward.1} parent=1 // loop_footer
      %s15 = sadd.s32 1, %s11
    $region7: #{rgb_moco_forward.1} parent=1 // loop_footer_branch
      %10 = sbr.rel target = $region3
    $region8: #{rgb_moco_forward.1} parent=1 // loop_exit
      _
    %580 = vsyncpa [#allocation3], 1
    %s581 = scalar_lea.sflag [#allocation3], 1
    %582 = vsyncpa %s581, 1

</llo_original>
